<compile_context>
chip_gen: v7x
topology: tpu7x:2x2x1
jax: 0.10.0
libtpu: 0.0.40
codegen_flags: <defaults>
</compile_context>

<pallas_src>
import functools
import math

import jax
import jax.numpy as jnp
from jax.experimental import pallas as pl
from jax.experimental.pallas import tpu as pltpu

# Tile caps (f32).  Worst-case double-buffered VMEM:
#   x: 1024*512*4*2 = 4 MiB, W^T: 512*256*4*2 = 1 MiB, out: 1024*256*4*2 = 2 MiB
# ~7 MiB total -> fits v5e's 16 MiB scoped-VMEM default (and easily v6e/v7x).
_MAX_TM = 1024
_MAX_TN = 256
_MAX_TK = 512
_MEGACORE_SPLIT_MIN = 256  # once batch >= this, give the M axis >= 2 blocks (v7x 2 TCs)


def _round_up(x, m):
    return ((x + m - 1) // m) * m


# ---------------------------------------------------------------------------
# Kernels
# ---------------------------------------------------------------------------
def _linear_bias_kernel(x_ref, wt_ref, b_ref, o_ref):
    """K fits in one tile: out = x @ W^T + b in a single MXU pass, no accumulator."""
    o_ref[...] = (
        jnp.dot(x_ref[...], wt_ref[...], preferred_element_type=jnp.float32)
        + b_ref[...]
    ).astype(o_ref.dtype)


def _linear_bias_ksplit_kernel(x_ref, wt_ref, b_ref, o_ref):
    """K split over grid axis 2; accumulate directly into the resident f32 out tile."""

    @pl.when(pl.program_id(2) == 0)
    def _():
        o_ref[...] = jnp.broadcast_to(b_ref[...], o_ref.shape).astype(o_ref.dtype)

    o_ref[...] += jnp.dot(x_ref[...], wt_ref[...], preferred_element_type=jnp.float32)


# ---------------------------------------------------------------------------
# One-time parameter preparation (hoisted out of the per-call path)
# ---------------------------------------------------------------------------
def prepare_linear_params(weight, bias, compute_dtype=jnp.float32):
    """Pre-transpose/pad nn.Linear params once (call at init, NOT per forward call).

    weight: [num_classes, input_dim] (PyTorch layout) -> W^T padded to [k_pad, n_pad]
    bias:   [num_classes]            -> f32, padded to [1, n_pad]

    The class (lane) axis is padded to a multiple of 128 so the kernel gets
    lane-dense, unmasked stores; K is left unpadded when it fits one tile.
    On v6e/v7x pass compute_dtype=jnp.bfloat16 to halve W/x bytes (accum stays f32).
    """
    num_classes, input_dim = weight.shape
    k_pad = input_dim if input_dim <= _MAX_TK else _round_up(input_dim, _MAX_TK)
    n128 = _round_up(num_classes, 128)
    n_pad = n128 if n128 <= _MAX_TN else _round_up(num_classes, _MAX_TN)

    w_t = jnp.pad(
        jnp.asarray(weight, compute_dtype).T,
        ((0, k_pad - input_dim), (0, n_pad - num_classes)),
    )
    b_p = jnp.pad(
        jnp.asarray(bias, jnp.float32), (0, n_pad - num_classes)
    ).reshape(1, n_pad)
    return w_t, b_p


def _choose_m_tiling(batch):
    if batch > _MAX_TM:
        tm = _MAX_TM
        m_pad = _round_up(batch, tm)
    elif batch >= 2 * _MEGACORE_SPLIT_MIN:
        # Two M blocks so the "parallel" M axis shards across both v7x TensorCores.
        tm = _round_up((batch + 1) // 2, 8)
        m_pad = 2 * tm
    else:
        # Single full-extent block (legal even when batch % 8 != 0): no HBM-side pad.
        tm = batch
        m_pad = batch
    return tm, m_pad


# ---------------------------------------------------------------------------
# Forward
# ---------------------------------------------------------------------------
@functools.partial(jax.jit, static_argnames=("num_classes",))
def linear_forward(x, w_t, b_p, *, num_classes):
    """out = x @ W.T + b using the prepared (pre-transposed / padded) parameters."""
    batch, input_dim = x.shape
    k_pad, n_pad = w_t.shape
    assert k_pad >= input_dim and b_p.shape == (1, n_pad)

    tm, m_pad = _choose_m_tiling(batch)
    tn = min(n_pad, _MAX_TN)
    tk = min(k_pad, _MAX_TK)
    grid_m, grid_n, grid_k = m_pad // tm, n_pad // tn, k_pad // tk

    x_c = x.astype(w_t.dtype)
    if m_pad != batch or k_pad != input_dim:
        x_c = jnp.pad(x_c, ((0, m_pad - batch), (0, k_pad - input_dim)))

    out_shape = jax.ShapeDtypeStruct((m_pad, n_pad), jnp.float32)

    if grid_k == 1:
        out = pl.pallas_call(
            _linear_bias_kernel,
            out_shape=out_shape,
            grid_spec=pltpu.PrefetchScalarGridSpec(
                num_scalar_prefetch=0,
                grid=(grid_m, grid_n),
                in_specs=[
                    pl.BlockSpec((tm, tk), lambda i, j: (i, 0)),   # x tile
                    pl.BlockSpec((tk, tn), lambda i, j: (0, j)),   # W^T tile
                    pl.BlockSpec((1, tn), lambda i, j: (0, j)),    # bias tile
                ],
                out_specs=pl.BlockSpec((tm, tn), lambda i, j: (i, j)),
            ),
            compiler_params=pltpu.CompilerParams(
                dimension_semantics=("parallel", "parallel"),
            ),
        )(x_c, w_t, b_p)
    else:
        out = pl.pallas_call(
            _linear_bias_ksplit_kernel,
            out_shape=out_shape,
            grid_spec=pltpu.PrefetchScalarGridSpec(
                num_scalar_prefetch=0,
                grid=(grid_m, grid_n, grid_k),
                in_specs=[
                    pl.BlockSpec((tm, tk), lambda i, j, k: (i, k)),  # x tile
                    pl.BlockSpec((tk, tn), lambda i, j, k: (k, j)),  # W^T tile
                    pl.BlockSpec((1, tn), lambda i, j, k: (0, j)),   # bias tile
                ],
                out_specs=pl.BlockSpec((tm, tn), lambda i, j, k: (i, j)),
            ),
            compiler_params=pltpu.CompilerParams(
                dimension_semantics=("parallel", "parallel", "arbitrary"),
            ),
        )(x_c, w_t, b_p)

    if m_pad != batch or n_pad != num_classes:
        out = out[:batch, :num_classes]
    return out


def multinomial_logistic_regression(x, weight, bias):
    """Drop-in forward matching the PyTorch module signature.

    For repeated calls, call prepare_linear_params() once and linear_forward() per
    step so the weight transpose/pad is not re-done every call.
    """
    w_t, b_p = prepare_linear_params(weight, bias)
    return linear_forward(x, w_t, b_p, num_classes=weight.shape[0])


def init_linear_params(key, input_dim, num_classes):
    """Deterministic init matching nn.Linear default: U(-1/sqrt(fan_in), 1/sqrt(fan_in))."""
    kw, kb = jax.random.split(key)
    bound = 1.0 / math.sqrt(input_dim)
    weight = jax.random.uniform(
        kw, (num_classes, input_dim), dtype=jnp.float32, minval=-bound, maxval=bound
    )
    bias = jax.random.uniform(
        kb, (num_classes,), dtype=jnp.float32, minval=-bound, maxval=bound
    )
    return weight, bias


if __name__ == "__main__":
    key = jax.random.PRNGKey(0)

    # --- Case 1: demo shapes from the original script (single-K-tile fast path) ---
    k_x, k_p, k_x2, k_p2 = jax.random.split(key, 4)
    batch, input_dim, num_classes = 8, 32, 10
    x = jax.random.normal(k_x, (batch, input_dim), dtype=jnp.float32)
    weight, bias = init_linear_params(k_p, input_dim, num_classes)

    w_t, b_p = prepare_linear_params(weight, bias)          # one-time, outside jit
    out = linear_forward(x, w_t, b_p, num_classes=num_classes)
    out = jax.block_until_ready(out)

    ref = x @ weight.T + bias
    assert out.shape == (batch, num_classes)
    assert jnp.allclose(out, ref, atol=1e-5, rtol=1e-5)

    # --- Case 2: input_dim > 512 exercises the K-split accumulate-into-output path ---
    batch2, input_dim2, num_classes2 = 16, 640, 10
    x2 = jax.random.normal(k_x2, (batch2, input_dim2), dtype=jnp.float32)
    weight2, bias2 = init_linear_params(k_p2, input_dim2, num_classes2)

    w_t2, b_p2 = prepare_linear_params(weight2, bias2)
    out2 = linear_forward(x2, w_t2, b_p2, num_classes=num_classes2)
    out2 = jax.block_until_ready(out2)

    ref2 = x2 @ weight2.T + bias2
    assert out2.shape == (batch2, num_classes2)
    assert jnp.allclose(out2, ref2, atol=1e-4, rtol=1e-5)

    print("KERNEL_OK")
</pallas_src>

<mosaic_0001>
module attributes {stable_mosaic.version = 11 : i64} {
  func.func @_linear_bias_kernel(%arg0: i32, %arg1: i32, %arg2: memref<8x32xf32, #tpu.memory_space<vmem>>, %arg3: memref<32x128xf32, #tpu.memory_space<vmem>>, %arg4: memref<1x128xf32, #tpu.memory_space<vmem>>, %arg5: memref<8x128xf32, #tpu.memory_space<vmem>>) attributes {dimension_semantics = [#tpu.dimension_semantics<parallel>, #tpu.dimension_semantics<parallel>], iteration_bounds = array<i64: 1, 1>, scalar_prefetch = 0 : i64, scratch_operands = 0 : i64, tpu.core_type = #tpu.core_type<tc>, window_params = [{transform_indices = @transform_0, window_bounds = array<i64: 8, 32>}, {transform_indices = @transform_1, window_bounds = array<i64: 32, 128>}, {transform_indices = @transform_2, window_bounds = array<i64: 1, 128>}, {transform_indices = @transform_3, window_bounds = array<i64: 8, 128>}]} {
    %c0 = arith.constant 0 : index
    %c0_0 = arith.constant 0 : index
    %0 = vector.load %arg2[%c0, %c0_0] : memref<8x32xf32, #tpu.memory_space<vmem>>, vector<8x32xf32>
    %c0_1 = arith.constant 0 : index
    %c0_2 = arith.constant 0 : index
    %1 = vector.load %arg3[%c0_1, %c0_2] : memref<32x128xf32, #tpu.memory_space<vmem>>, vector<32x128xf32>
    %cst = arith.constant dense<0.000000e+00> : vector<8x128xf32>
    %2 = tpu.matmul %0, %1, %cst {dimension_numbers = #tpu.dot_dimension_numbers<[1], [0], [0], [1], [0, 0, 1, 1], [], []>} : vector<8x32xf32>, vector<32x128xf32>, vector<8x128xf32> -> vector<8x128xf32>
    %c0_3 = arith.constant 0 : index
    %c0_4 = arith.constant 0 : index
    %3 = vector.load %arg4[%c0_3, %c0_4] : memref<1x128xf32, #tpu.memory_space<vmem>>, vector<1x128xf32>
    %4 = vector.broadcast %3 : vector<1x128xf32> to vector<8x128xf32>
    %5 = arith.addf %2, %4 : vector<8x128xf32>
    %c0_5 = arith.constant 0 : index
    %c0_6 = arith.constant 0 : index
    %6 = vector.load %arg5[%c0_5, %c0_6] : memref<8x128xf32, #tpu.memory_space<vmem>>, vector<8x128xf32>
    tpu.vector_store %arg5[%c0_5, %c0_6], %5 {strides = array<i32>} : memref<8x128xf32, #tpu.memory_space<vmem>>, vector<8x128xf32>,
    return
  }
  func.func @transform_0(%arg0: i32, %arg1: i32) -> (i32, i32) {
    %c0_i32 = arith.constant 0 : i32
    %c0_i32_0 = arith.constant 0 : i32
    return %arg0, %c0_i32 : i32, i32
  }
  func.func @transform_1(%arg0: i32, %arg1: i32) -> (i32, i32) {
    %c0_i32 = arith.constant 0 : i32
    %c0_i32_0 = arith.constant 0 : i32
    return %c0_i32, %arg1 : i32, i32
  }
  func.func @transform_2(%arg0: i32, %arg1: i32) -> (i32, i32) {
    %c0_i32 = arith.constant 0 : i32
    %c0_i32_0 = arith.constant 0 : i32
    return %c0_i32, %arg1 : i32, i32
  }
  func.func @transform_3(%arg0: i32, %arg1: i32) -> (i32, i32) {
    %c0_i32 = arith.constant 0 : i32
    return %arg0, %arg1 : i32, i32
  }
}

</mosaic_0001>

<llo_original>
// kernel: linear_forward.1
$region0: #{linear_forward.1}
  #allocation0 [shape = 'u32[]', space=smem, size = 0x4, offset = 0x4, fixed_abs, tag = 'smem constant byte address 0x4 - core index']
  #allocation1 [shape = 'u32[144,128]{1,0:T(1,128)}', space=vmem, size = 0x12000, scoped, tag = 'internal scratch']
  %s0 = inlined_call_operand.hbm [shape: f32[8,32], index: 0, kind: input, shape index: {}]
  %s1 = inlined_call_operand.hbm [shape: f32[32,128], index: 1, kind: input, shape index: {}]
  %s2 = inlined_call_operand.vmem [shape: f32[1,128], index: 2, kind: input, shape index: {}]
  %s3 = inlined_call_operand.hbm [shape: f32[8,128], index: 3, kind: output, shape index: {}]
  %s4 = sld [smem:[#allocation0]]
  $region30: #{linear_forward.1} parent=0
    _
  %s6 = ssub.s32 1, %s4
  %s7 = scalar_select 0, %s6, %s4
  $region1: #{linear_forward.1} parent=0
    #allocation2 [shape = 'u8[4096]{0}', space=vmem, size = 0x1000, scoped, tag = 'input window, operand 0, single buffered']
    #allocation3 [shape = 's32[1]{0}', space=sflag, size = 0x4, scoped, tag = 'scoped memory for linear_forward.1']
    #allocation4 [shape = 's32[1]{0}', space=sflag, size = 0x4, scoped, tag = 'scoped memory for linear_forward.1']
    #allocation5 [shape = 'u8[16384]{0}', space=vmem, size = 0x4000, scoped, tag = 'input window, operand 1, single buffered']
    #allocation6 [shape = 's32[1]{0}', space=sflag, size = 0x4, scoped, tag = 'scoped memory for linear_forward.1']
    #allocation7 [shape = 'u8[4096]{0}', space=vmem, size = 0x1000, scoped, tag = 'output window, operand 0, single buffered']
    %8 = vsyncpa [#allocation3], 0
    %9 = vsyncpa [#allocation6], 0
    %10 = vsyncpa [#allocation4], 0
    // Predicated region
    $region2: #{linear_forward.1} parent=1 // pred_check
      _
    $region3: #{linear_forward.1} parent=1 // pred_check_branch
      %12 = sbr.rel (0) target = $region5
    $region4: #{linear_forward.1} parent=1 // pred_region
      %s14 = ssub.s32 128, 128
      %15 = vsyncadd [#allocation3], %s14
      %s17 = sshll.u32 [#allocation2], 4
      %s18 = int_to_ptr.vmem [resolvable:$true] %s17
      %20 = dma.hbm_to_vmem [thread:$0]  %s0, 128, %s18, [#allocation3]
    $region5: #{linear_forward.1} parent=1 // pred_fallthru
      _
    // Predicated region
    $region6: #{linear_forward.1} parent=1 // pred_check
      _
    $region7: #{linear_forward.1} parent=1 // pred_check_branch
      %22 = sbr.rel (0) target = $region9
    $region8: #{linear_forward.1} parent=1 // pred_region
      %s24 = ssub.s32 512, 512
      %25 = vsyncadd [#allocation6], %s24
      %s26 = sshll.u32 [#allocation5], 4
      %s27 = int_to_ptr.vmem [resolvable:$true] %s26
      %32 = dma.hbm_to_vmem [thread:$0]  %s1, 512, %s27, [#allocation6], 128, 128, 8
    $region9: #{linear_forward.1} parent=1 // pred_fallthru
      _
    // Predicated region
    $region10: #{linear_forward.1} parent=1 // pred_check
      _
    $region11: #{linear_forward.1} parent=1 // pred_check_branch
      %34 = sbr.rel (0) target = $region13
    $region12: #{linear_forward.1} parent=1 // pred_region
      _
    $region13: #{linear_forward.1} parent=1 // pred_fallthru
      _
    // Predicated region
    $region14: #{linear_forward.1} parent=1 // pred_check
      _
    $region15: #{linear_forward.1} parent=1 // pred_check_branch
      %36 = sbr.rel (0) target = $region17
    $region16: #{linear_forward.1} parent=1 // pred_region
      %37 = dma.done [#allocation3], 128
    $region17: #{linear_forward.1} parent=1 // pred_fallthru
      _
    // Predicated region
    $region18: #{linear_forward.1} parent=1 // pred_check
      _
    $region19: #{linear_forward.1} parent=1 // pred_check_branch
      %39 = sbr.rel (0) target = $region21
    $region20: #{linear_forward.1} parent=1 // pred_region
      %40 = dma.done [#allocation6], 512
    $region21: #{linear_forward.1} parent=1 // pred_fallthru
      _
    %v41 = vld [vmem:[#allocation2] sm:$0xff]
    %v42 = vld [vmem:[#allocation5] sm:$0xff]
    %v43 = vld [vmem:[#allocation5 + $0x8] sm:$0xff]
    %v44 = vld [vmem:[#allocation5 + $0x10] sm:$0xff]
    %v45 = vld [vmem:[#allocation5 + $0x18] sm:$0xff]
    %v46 = vld [vmem:[%s2] sm:$0x1]
    %v48 = vlaneseq
    %v49 = vshrl.u32 %v48, 7
    %v50 = vsub.s32 0, %v49
    %v51 = vrot.slane %v46, %v50
    %vm53 = vcmask 261120
    %v55 = vsel %vm53, %v41, 0
    %57 = vmatprep.subr.mxu0 0.0
    %58 = vmatpush1.msra.mxu0 %v42
    %59 = vmatprep.subr.mxu0 0.0
    %60 = vmatpush1.msra.mxu0 %v43
    %61 = vmatprep.subr.mxu0 0.0
    %62 = vmatpush1.msra.mxu0 %v44
    %63 = vmatprep.subr.mxu0 0.0
    %64 = vmatpush1.msra.mxu0 %v45
    %65 = vmatprep.subr.mxu0 0.0
    %66 = vmatpush1.msra.mxu0 0.0
    %67 = vmatprep.subr.mxu0 0.0
    %68 = vmatpush1.msra.mxu0 0.0
    %69 = vmatprep.subr.mxu0 0.0
    %70 = vmatpush1.msra.mxu0 0.0
    %71 = vmatprep.subr.mxu0 0.0
    %72 = vmatpush1.msra.mxu0 0.0
    %73 = vmatprep.subr.mxu0 0.0
    %74 = vmatpush1.msra.mxu0 0.0
    %75 = vmatprep.subr.mxu0 0.0
    %76 = vmatpush1.msra.mxu0 0.0
    %77 = vmatprep.subr.mxu0 0.0
    %78 = vmatpush1.msra.mxu0 0.0
    %79 = vmatprep.subr.mxu0 0.0
    %80 = vmatpush1.msra.mxu0 0.0
    %81 = vmatprep.subr.mxu0 0.0
    %82 = vmatpush1.msra.mxu0 0.0
    %83 = vmatprep.subr.mxu0 0.0
    %84 = vmatpush1.msra.mxu0 0.0
    %85 = vmatprep.subr.mxu0 0.0
    %86 = vmatpush1.msra.mxu0 0.0
    %87 = vmatprep.subr.mxu0 0.0
    %88 = vmatpush1.msra.mxu0 0.0
    %89 = vmatprep.subr.mxu0 0.0
    %90 = vmatpush1.msra.mxu0 0.0
    %91 = vmatprep.subr.mxu0 0.0
    %92 = vmatpush1.msra.mxu0 0.0
    %93 = vmatprep.subr.mxu0 0.0
    %94 = vmatpush1.msra.mxu0 0.0
    %95 = vmatprep.subr.mxu0 0.0
    %96 = vmatpush1.msra.mxu0 0.0
    %97 = vmatprep.subr.mxu0 0.0
    %98 = vmatpush1.msra.mxu0 0.0
    %99 = vmatprep.subr.mxu0 0.0
    %100 = vmatpush1.msra.mxu0 0.0
    %101 = vmatprep.subr.mxu0 0.0
    %102 = vmatpush1.msra.mxu0 0.0
    %103 = vmatprep.subr.mxu0 0.0
    %104 = vmatpush1.msra.mxu0 0.0
    %105 = vmatprep.subr.mxu0 0.0
    %106 = vmatpush1.msra.mxu0 0.0
    %107 = vmatprep.subr.mxu0 0.0
    %108 = vmatpush1.msra.mxu0 0.0
    %109 = vmatprep.subr.mxu0 0.0
    %110 = vmatpush1.msra.mxu0 0.0
    %111 = vmatprep.subr.mxu0 0.0
    %112 = vmatpush1.msra.mxu0 0.0
    %113 = vmatprep.subr.mxu0 0.0
    %114 = vmatpush1.msra.mxu0 0.0
    %115 = vmatprep.subr.mxu0 0.0
    %116 = vmatpush1.msra.mxu0 0.0
    %117 = vmatprep.subr.mxu0 0.0
    %118 = vmatpush1.msra.mxu0 0.0
    %119 = vmatprep.subr.mxu0 0.0
    %120 = vmatpush1.msra.mxu0 0.0
    %121 = vmatprep.mubr.f32.mxu0 0.0
    %122 = vmatmul.mubr.f32.gmra.mrb[0].mxu0 %v55
    %v123 = vpop.f32.mrb[0].mxu0
    %v124 = vadd.f32 %v51, %v123
    %v125 = vpop.f32.mrb[0].mxu0
    %126 = vdwg.mxu0
    %127 = vst [vmem:[#allocation7] sm:$0xff] %v124
    // Predicated region
    $region22: #{linear_forward.1} parent=1 // pred_check
      _
    $region23: #{linear_forward.1} parent=1 // pred_check_branch
      %129 = sbr.rel (0) target = $region25
    $region24: #{linear_forward.1} parent=1 // pred_region
      %s131 = ssub.s32 128, 128
      %132 = vsyncadd [#allocation4], %s131
      %s134 = sshll.u32 [#allocation7], 4
      %s135 = int_to_ptr.vmem [resolvable:$true] %s134
      %137 = dma.vmem_to_hbm [thread:$0]  %s135, 128, %s3, [#allocation4]
    $region25: #{linear_forward.1} parent=1 // pred_fallthru
      _
    // Predicated region
    $region26: #{linear_forward.1} parent=1 // pred_check
      _
    $region27: #{linear_forward.1} parent=1 // pred_check_branch
      %139 = sbr.rel (0) target = $region29
    $region28: #{linear_forward.1} parent=1 // pred_region
      %140 = dma.done [#allocation4], 128
    $region29: #{linear_forward.1} parent=1 // pred_fallthru
      _
    %141 = vsyncpa [#allocation3], 1
    %142 = vsyncpa [#allocation6], 1
    %143 = vsyncpa [#allocation4], 1

</llo_original>
